<compile_context>
chip_gen: v5e
topology: v5e:2x2
jax: 0.10.0
libtpu: 0.0.40
codegen_flags: <defaults>
</compile_context>

<pallas_src>
import functools
import math

import jax
import jax.numpy as jnp
from jax import lax
from jax.experimental import pallas as pl
from jax.experimental.pallas import tpu as pltpu

_LANE = 128
_MIN_TILE_BYTES = 1 * 1024 * 1024  # target >= ~1 MiB of (lane-padded) payload per grid step


def _round_up(n: int, m: int) -> int:
    return ((n + m - 1) // m) * m


def _cdiv(a: int, b: int) -> int:
    return -(-a // b)


def _sublane_multiple(dtype) -> int:
    itemsize = jnp.dtype(dtype).itemsize
    return max(8, 32 // itemsize)  # f32 -> 8, bf16 -> 16, int8/fp8 -> 32


def _vmem_budget_and_limit():
    """Returns (budget for double-buffered in+out tiles, scoped VMEM limit), per chip gen."""
    try:
        cap = int(pltpu.get_tpu_info().vmem_capacity_bytes)
    except Exception:
        cap = 64 * 1024 * 1024  # conservative fallback: v7x per-core VMEM
    limit = min(cap // 2, 64 * 1024 * 1024)  # v7x: 32 MiB, v5e/v6e: 64 MiB
    return limit // 2, limit                 # tile budget: 16 MiB / 32 MiB


def _derive_row_tile(rows: int, bytes_per_row: int, sub: int, budget: int) -> int:
    """Row-tile size: as big as the double-buffered VMEM budget allows, but keep >= ~8 grid
    steps (v7x has 2 TCs sharing a 'parallel' grid axis) without dropping below ~1 MiB/tile."""
    tr_budget = max(sub, ((budget // (2 * bytes_per_row)) // sub) * sub)
    tr_split = _round_up(_cdiv(rows, 8), sub)
    tr_floor = max(sub, ((_MIN_TILE_BYTES // bytes_per_row) // sub) * sub)
    tr = min(tr_budget, max(tr_split, tr_floor))
    tr = min(tr, _round_up(rows, sub))
    return max(sub, tr)


def _pad_rows_kernel(x_ref, o_ref, *, in_len, out_len, g, pad_value):
    """One row tile holding g packed logical rows per physical row.

    Splat pad_value over the whole (lane-dense) tile, then overwrite the g prefixes with
    the corresponding input slices (static, unrolled slice copies)."""
    o_ref[...] = jnp.full(o_ref.shape, pad_value, dtype=o_ref.dtype)
    for k in range(g):  # g <= 128, static unroll
        o_ref[:, k * out_len:k * out_len + in_len] = x_ref[:, k * in_len:(k + 1) * in_len]


def _pad_cols_kernel(x_ref, o_ref, *, in_len, tc, pad_value):
    """Column-tiled variant for very wide rows: per column block choose copy / splat / mix."""
    col0 = pl.program_id(1) * tc

    @pl.when(col0 + tc <= in_len)            # block fully inside the input: plain copy
    def _():
        o_ref[...] = x_ref[...]

    @pl.when(col0 >= in_len)                 # block fully in the pad region: constant splat
    def _():
        o_ref[...] = jnp.full(o_ref.shape, pad_value, dtype=o_ref.dtype)

    @pl.when(jnp.logical_and(col0 < in_len, col0 + tc > in_len))   # straddling block
    def _():
        idx = col0 + lax.broadcasted_iota(jnp.int32, o_ref.shape, 1)
        o_ref[...] = jnp.where(idx < in_len, x_ref[...],
                               jnp.full(o_ref.shape, pad_value, dtype=o_ref.dtype))


def _pad_rows_tiled(x2p, in_len, out_len, g, pad_val, *, logical_rows):
    prows, in_w = x2p.shape
    out_w = g * out_len
    dtype = x2p.dtype
    itemsize = jnp.dtype(dtype).itemsize
    sub = _sublane_multiple(dtype)
    budget, vmem_limit = _vmem_budget_and_limit()
    # Lane-padded footprint: a (tr, W) VMEM block physically occupies (tr, round_up(W,128)).
    bytes_per_row = (_round_up(in_w, _LANE) + _round_up(out_w, _LANE)) * itemsize
    tr = _derive_row_tile(prows, bytes_per_row, sub, budget)
    grid = (_cdiv(prows, tr),)
    kernel = functools.partial(_pad_rows_kernel, in_len=in_len, out_len=out_len,
                               g=g, pad_value=pad_val)
    return pl.pallas_call(
        kernel,
        out_shape=jax.ShapeDtypeStruct((prows, out_w), dtype),
        grid=grid,
        # Last block dims equal the full array dims, so the (8,128) rule is satisfied for
        # any in_len / max_length; second-to-last (tr) is a multiple of the sublane packing.
        in_specs=[pl.BlockSpec((tr, in_w), lambda i: (i, 0))],
        out_specs=pl.BlockSpec((tr, out_w), lambda i: (i, 0)),
        compiler_params=pltpu.CompilerParams(
            dimension_semantics=("parallel",),
            vmem_limit_bytes=vmem_limit),
        cost_estimate=pl.CostEstimate(
            flops=0, transcendentals=0,
            bytes_accessed=logical_rows * (in_len + out_len) * itemsize),
    )(x2p)


def _pad_cols_tiled(x2, max_length, pad_val, *, tr=None, tc=None):
    """2-D (row, column) tiled path for rows too wide for a single row tile in VMEM."""
    rows, in_len = x2.shape
    dtype = x2.dtype
    itemsize = jnp.dtype(dtype).itemsize
    sub = _sublane_multiple(dtype)
    budget, vmem_limit = _vmem_budget_and_limit()
    if tc is None:
        tc = min(_round_up(max_length, _LANE), 2048)
    if tr is None:
        tr = _derive_row_tile(rows, 2 * tc * itemsize, sub, budget)
    in_col_blocks = _cdiv(in_len, tc)
    grid = (_cdiv(rows, tr), _cdiv(max_length, tc))
    kernel = functools.partial(_pad_cols_kernel, in_len=in_len, tc=tc, pad_value=pad_val)
    return pl.pallas_call(
        kernel,
        out_shape=jax.ShapeDtypeStruct((rows, max_length), dtype),
        grid=grid,
        # Clamp the input column-block index so pure-pad column blocks never DMA past the
        # input extent (their x_ref is unused).
        in_specs=[pl.BlockSpec((tr, tc),
                               lambda i, j: (i, jnp.minimum(j, in_col_blocks - 1)))],
        out_specs=pl.BlockSpec((tr, tc), lambda i, j: (i, j)),
        compiler_params=pltpu.CompilerParams(
            dimension_semantics=("parallel", "parallel"),
            vmem_limit_bytes=vmem_limit),
        cost_estimate=pl.CostEstimate(
            flops=0, transcendentals=0,
            bytes_accessed=rows * (in_len + max_length) * itemsize),
    )(x2)


def pad_transform(x, max_length: int, pad_value: int):
    """Pallas equivalent of PadTransform.forward.

    If x.shape[-1] < max_length, right-pad the last axis with float(pad_value);
    otherwise return x unchanged (no truncation), matching the PyTorch reference.
    """
    in_len = x.shape[-1]
    if in_len >= max_length:
        return x

    pad_val = float(pad_value)
    lead = x.shape[:-1]
    rows = math.prod(lead) if lead else 1

    # Degenerate cases: nothing to copy, just emit the constant-filled result.
    if rows == 0 or in_len == 0:
        return jnp.full(lead + (max_length,), pad_val, dtype=x.dtype)

    dtype = x.dtype
    itemsize = jnp.dtype(dtype).itemsize
    sub = _sublane_multiple(dtype)
    budget, _ = _vmem_budget_and_limit()

    x2 = x.reshape(rows, in_len)

    # Lane packing: pack G logical rows into one lane-dense (multiple-of-128) output row.
    g = 1
    if max_length < _LANE:
        g_cand = math.lcm(max_length, _LANE) // max_length  # <= 128
        if rows % g_cand == 0:
            g = g_cand

    in_w, out_w = g * in_len, g * max_length
    bytes_per_row = (_round_up(in_w, _LANE) + _round_up(out_w, _LANE)) * itemsize

    if 2 * sub * bytes_per_row <= budget:
        # Contiguous (free) reshape: (rows, in_len) -> (rows/G, G*in_len).
        x2p = x2.reshape(rows // g, in_w)
        out2 = _pad_rows_tiled(x2p, in_len, max_length, g, pad_val, logical_rows=rows)
        out2 = out2.reshape(rows, max_length)
    else:
        # Even a minimal row tile would blow VMEM (extremely wide rows): column tiling.
        out2 = _pad_cols_tiled(x2, max_length, pad_val)

    return out2.reshape(*lead, max_length)


if __name__ == "__main__":
    key = jax.random.PRNGKey(0)
    k1, k2, k3, k4, k5, k6 = jax.random.split(key, 6)

    def _ref_pad(x, max_length, pad_value):
        in_len = x.shape[-1]
        if in_len >= max_length:
            return x
        pads = [(0, 0)] * (x.ndim - 1) + [(0, max_length - in_len)]
        return jnp.pad(x, pads, constant_values=float(pad_value))

    # 1) Lane-packed path (G=8): (batch=2, channels=4, seq=8) f32 padded to 16.
    x = jax.random.normal(k1, (2, 4, 8), dtype=jnp.float32)
    out = jax.block_until_ready(pad_transform(x, 16, 1))
    assert out.shape == (2, 4, 16) and out.dtype == x.dtype
    assert bool(jnp.allclose(out, _ref_pad(x, 16, 1))), "mismatch: packed G=8 path"

    # 2) Lane-packed path (G=16) with many rows and a partial row tile: (2, 600, 24) -> 40.
    x_big = jax.random.normal(k2, (2, 600, 24), dtype=jnp.float32)
    out_big = jax.block_until_ready(pad_transform(x_big, 40, 1))
    assert out_big.shape == (2, 600, 40)
    assert bool(jnp.allclose(out_big, _ref_pad(x_big, 40, 1))), "mismatch: packed G=16 path"

    # 3) Unpacked row path: rows not divisible by G (3 % 8 != 0), odd in_len.
    x_odd = jax.random.normal(k3, (3, 9), dtype=jnp.float32)
    out_odd = jax.block_until_ready(pad_transform(x_odd, 16, 7))
    assert bool(jnp.allclose(out_odd, _ref_pad(x_odd, 16, 7))), "mismatch: unpacked fallback"

    # 4) Unpacked row path, already lane-scale output width (max_length >= 128).
    x_wide = jax.random.normal(k4, (2, 4, 100), dtype=jnp.float32)
    out_wide = jax.block_until_ready(pad_transform(x_wide, 160, 2))
    assert bool(jnp.allclose(out_wide, _ref_pad(x_wide, 160, 2))), "mismatch: wide row path"

    # 5) bf16 packed path (sublane packing multiple = 16).
    x_bf16 = jax.random.normal(k5, (2, 4, 8), dtype=jnp.bfloat16)
    out_bf16 = jax.block_until_ready(pad_transform(x_bf16, 16, 1))
    assert out_bf16.dtype == jnp.bfloat16
    assert bool(jnp.allclose(out_bf16.astype(jnp.float32),
                             _ref_pad(x_bf16, 16, 1).astype(jnp.float32))), "mismatch: bf16"

    # 6) Column-tiled fallback (forced small tiles to exercise copy/splat/straddle blocks).
    x_cols = jax.random.normal(k6, (16, 200), dtype=jnp.float32)
    out_cols = jax.block_until_ready(_pad_cols_tiled(x_cols, 300, -2.0, tr=8, tc=128))
    assert bool(jnp.allclose(out_cols, _ref_pad(x_cols, 300, -2))), "mismatch: column-tiled"

    # 7) No-op branch (input already >= max_length): returned unchanged, no truncation.
    y = jax.random.normal(k1, (2, 4, 32), dtype=jnp.float32)
    out_noop = jax.block_until_ready(pad_transform(y, 16, 1))
    assert out_noop.shape == y.shape and bool(jnp.allclose(out_noop, y))

    print("KERNEL_OK")
</pallas_src>

<mosaic_0001>
module attributes {stable_mosaic.version = 11 : i64} {
  func.func @_pad_rows_kernel(%arg0: i32, %arg1: memref<8x64xf32, #tpu.memory_space<vmem>>, %arg2: memref<8x128xf32, #tpu.memory_space<vmem>>) attributes {dimension_semantics = [#tpu.dimension_semantics<parallel>], iteration_bounds = array<i64: 1>, scalar_prefetch = 0 : i64, scratch_operands = 0 : i64, tpu.core_type = #tpu.core_type<tc>, window_params = [{transform_indices = @transform_0, window_bounds = array<i64: 8, 64>}, {transform_indices = @transform_1, window_bounds = array<i64: 8, 128>}]} {
    %cst = arith.constant 1.000000e+00 : f32
    %0 = vector.broadcast %cst : f32 to vector<8x128xf32>
    %c0 = arith.constant 0 : index
    %c0_0 = arith.constant 0 : index
    %1 = vector.load %arg2[%c0, %c0_0] : memref<8x128xf32, #tpu.memory_space<vmem>>, vector<8x128xf32>
    tpu.vector_store %arg2[%c0, %c0_0], %0 {strides = array<i32>} : memref<8x128xf32, #tpu.memory_space<vmem>>, vector<8x128xf32>,
    %c0_1 = arith.constant 0 : index
    %c0_2 = arith.constant 0 : index
    %2 = vector.load %arg1[%c0_1, %c0_2] : memref<8x64xf32, #tpu.memory_space<vmem>>, vector<8x8xf32>
    %c0_3 = arith.constant 0 : index
    %c0_4 = arith.constant 0 : index
    %3 = vector.load %arg2[%c0_3, %c0_4] : memref<8x128xf32, #tpu.memory_space<vmem>>, vector<8x8xf32>
    tpu.vector_store %arg2[%c0_3, %c0_4], %2 {strides = array<i32>} : memref<8x128xf32, #tpu.memory_space<vmem>>, vector<8x8xf32>,
    %c0_5 = arith.constant 0 : index
    %c8 = arith.constant 8 : index
    %4 = vector.load %arg1[%c0_5, %c8] : memref<8x64xf32, #tpu.memory_space<vmem>>, vector<8x8xf32>
    %c0_6 = arith.constant 0 : index
    %c16 = arith.constant 16 : index
    %5 = vector.load %arg2[%c0_6, %c16] : memref<8x128xf32, #tpu.memory_space<vmem>>, vector<8x8xf32>
    tpu.vector_store %arg2[%c0_6, %c16], %4 {strides = array<i32>} : memref<8x128xf32, #tpu.memory_space<vmem>>, vector<8x8xf32>,
    %c0_7 = arith.constant 0 : index
    %c16_8 = arith.constant 16 : index
    %6 = vector.load %arg1[%c0_7, %c16_8] : memref<8x64xf32, #tpu.memory_space<vmem>>, vector<8x8xf32>
    %c0_9 = arith.constant 0 : index
    %c32 = arith.constant 32 : index
    %7 = vector.load %arg2[%c0_9, %c32] : memref<8x128xf32, #tpu.memory_space<vmem>>, vector<8x8xf32>
    tpu.vector_store %arg2[%c0_9, %c32], %6 {strides = array<i32>} : memref<8x128xf32, #tpu.memory_space<vmem>>, vector<8x8xf32>,
    %c0_10 = arith.constant 0 : index
    %c24 = arith.constant 24 : index
    %8 = vector.load %arg1[%c0_10, %c24] : memref<8x64xf32, #tpu.memory_space<vmem>>, vector<8x8xf32>
    %c0_11 = arith.constant 0 : index
    %c48 = arith.constant 48 : index
    %9 = vector.load %arg2[%c0_11, %c48] : memref<8x128xf32, #tpu.memory_space<vmem>>, vector<8x8xf32>
    tpu.vector_store %arg2[%c0_11, %c48], %8 {strides = array<i32>} : memref<8x128xf32, #tpu.memory_space<vmem>>, vector<8x8xf32>,
    %c0_12 = arith.constant 0 : index
    %c32_13 = arith.constant 32 : index
    %10 = vector.load %arg1[%c0_12, %c32_13] : memref<8x64xf32, #tpu.memory_space<vmem>>, vector<8x8xf32>
    %c0_14 = arith.constant 0 : index
    %c64 = arith.constant 64 : index
    %11 = vector.load %arg2[%c0_14, %c64] : memref<8x128xf32, #tpu.memory_space<vmem>>, vector<8x8xf32>
    tpu.vector_store %arg2[%c0_14, %c64], %10 {strides = array<i32>} : memref<8x128xf32, #tpu.memory_space<vmem>>, vector<8x8xf32>,
    %c0_15 = arith.constant 0 : index
    %c40 = arith.constant 40 : index
    %12 = vector.load %arg1[%c0_15, %c40] : memref<8x64xf32, #tpu.memory_space<vmem>>, vector<8x8xf32>
    %c0_16 = arith.constant 0 : index
    %c80 = arith.constant 80 : index
    %13 = vector.load %arg2[%c0_16, %c80] : memref<8x128xf32, #tpu.memory_space<vmem>>, vector<8x8xf32>
    tpu.vector_store %arg2[%c0_16, %c80], %12 {strides = array<i32>} : memref<8x128xf32, #tpu.memory_space<vmem>>, vector<8x8xf32>,
    %c0_17 = arith.constant 0 : index
    %c48_18 = arith.constant 48 : index
    %14 = vector.load %arg1[%c0_17, %c48_18] : memref<8x64xf32, #tpu.memory_space<vmem>>, vector<8x8xf32>
    %c0_19 = arith.constant 0 : index
    %c96 = arith.constant 96 : index
    %15 = vector.load %arg2[%c0_19, %c96] : memref<8x128xf32, #tpu.memory_space<vmem>>, vector<8x8xf32>
    tpu.vector_store %arg2[%c0_19, %c96], %14 {strides = array<i32>} : memref<8x128xf32, #tpu.memory_space<vmem>>, vector<8x8xf32>,
    %c0_20 = arith.constant 0 : index
    %c56 = arith.constant 56 : index
    %16 = vector.load %arg1[%c0_20, %c56] : memref<8x64xf32, #tpu.memory_space<vmem>>, vector<8x8xf32>
    %c0_21 = arith.constant 0 : index
    %c112 = arith.constant 112 : index
    %17 = vector.load %arg2[%c0_21, %c112] : memref<8x128xf32, #tpu.memory_space<vmem>>, vector<8x8xf32>
    tpu.vector_store %arg2[%c0_21, %c112], %16 {strides = array<i32>} : memref<8x128xf32, #tpu.memory_space<vmem>>, vector<8x8xf32>,
    return
  }
  func.func @transform_0(%arg0: i32) -> (i32, i32) {
    %c0_i32 = arith.constant 0 : i32
    %c0_i32_0 = arith.constant 0 : i32
    return %arg0, %c0_i32 : i32, i32
  }
  func.func @transform_1(%arg0: i32) -> (i32, i32) {
    %c0_i32 = arith.constant 0 : i32
    %c0_i32_0 = arith.constant 0 : i32
    return %arg0, %c0_i32 : i32, i32
  }
}

</mosaic_0001>

<llo_original>
// kernel: tpu_custom_call.1
$region0: #{tpu_custom_call.1}
  #allocation0 [shape = 'u32[]', space=smem, size = 0x4, offset = 0x4, fixed_abs, tag = 'smem constant byte address 0x4 - core index']
  #allocation1 [shape = 'u32[72,128]{1,0:T(1,128)}', space=vmem, size = 0x9000, scoped, tag = 'internal scratch']
  %s0 = inlined_call_operand.hbm [shape: f32[1,64], index: 0, kind: input, shape index: {}]
  %s1 = inlined_call_operand.hbm [shape: f32[1,128], index: 1, kind: output, shape index: {}]
  %s2 = sld [smem:[#allocation0]]
  $region18: #{tpu_custom_call.1} parent=0
    _
  %s4 = ssub.s32 1, %s2
  %s5 = scalar_select 0, %s4, %s2
  $region1: #{tpu_custom_call.1} parent=0
    #allocation2 [shape = 'u8[4096]{0}', space=vmem, size = 0x1000, scoped, tag = 'input window, operand 0, single buffered']
    #allocation3 [shape = 's32[1]{0}', space=sflag, size = 0x4, scoped, tag = 'scoped memory for tpu_custom_call.1']
    #allocation4 [shape = 's32[1]{0}', space=sflag, size = 0x4, scoped, tag = 'scoped memory for tpu_custom_call.1']
    #allocation5 [shape = 'u8[4096]{0}', space=vmem, size = 0x1000, scoped, tag = 'output window, operand 0, single buffered']
    %6 = vsyncpa [#allocation3], 0
    %7 = vsyncpa [#allocation4], 0
    // Predicated region
    $region2: #{tpu_custom_call.1} parent=1 // pred_check
      _
    $region3: #{tpu_custom_call.1} parent=1 // pred_check_branch
      %9 = sbr.rel (0) target = $region5
    $region4: #{tpu_custom_call.1} parent=1 // pred_region
      %11 = vsyncadd [#allocation3], 112
      %s12 = sshll.u32 %s0, 4
      %s13 = int_to_ptr.hbm [resolvable:$true] %s12
      %s14 = sshll.u32 [#allocation2], 4
      %s15 = int_to_ptr.vmem [resolvable:$true] %s14
      %20 = dma.hbm_to_vmem [thread:$0]  %s13, 16, %s15, [#allocation3], 16, 16, 1
    $region5: #{tpu_custom_call.1} parent=1 // pred_fallthru
      _
    // Predicated region
    $region6: #{tpu_custom_call.1} parent=1 // pred_check
      _
    $region7: #{tpu_custom_call.1} parent=1 // pred_check_branch
      %22 = sbr.rel (0) target = $region9
    $region8: #{tpu_custom_call.1} parent=1 // pred_region
      %24 = dma.done [#allocation3], 128
    $region9: #{tpu_custom_call.1} parent=1 // pred_fallthru
      _
    %25 = vst [vmem:[#allocation5] sm:$0xff] 1.0
    %v26 = vld [vmem:[#allocation2] sm:$0xff]
    %vm27 = vcmask 64512
    %28 = vst.msk [vmem:[#allocation5] sm:$0xff] %vm27, %v26
    %v29 = vld [vmem:[#allocation2] sm:$0xff]
    %31 = vrot.lane.b32.xlu0 %v29, 8
    %v32 = vpop.permute.xlu0 %31
    %vm34 = vcmask 195712
    %35 = vst.msk [vmem:[#allocation5] sm:$0xff] %vm34, %v32
    %v36 = vld [vmem:[#allocation2] sm:$0xff]
    %38 = vrot.lane.b32.xlu0 %v36, 16
    %v39 = vpop.permute.xlu0 %38
    %vm41 = vcmask 326912
    %42 = vst.msk [vmem:[#allocation5] sm:$0xff] %vm41, %v39
    %v43 = vld [vmem:[#allocation2] sm:$0xff]
    %45 = vrot.lane.b32.xlu0 %v43, 24
    %v46 = vpop.permute.xlu0 %45
    %vm48 = vcmask 458112
    %49 = vst.msk [vmem:[#allocation5] sm:$0xff] %vm48, %v46
    %v50 = vld [vmem:[#allocation2] sm:$0xff]
    %52 = vrot.lane.b32.xlu0 %v50, 32
    %v53 = vpop.permute.xlu0 %52
    %vm55 = vcmask 589312
    %56 = vst.msk [vmem:[#allocation5] sm:$0xff] %vm55, %v53
    %v57 = vld [vmem:[#allocation2] sm:$0xff]
    %59 = vrot.lane.b32.xlu0 %v57, 40
    %v60 = vpop.permute.xlu0 %59
    %vm62 = vcmask 720512
    %63 = vst.msk [vmem:[#allocation5] sm:$0xff] %vm62, %v60
    %v64 = vld [vmem:[#allocation2] sm:$0xff]
    %66 = vrot.lane.b32.xlu0 %v64, 48
    %v67 = vpop.permute.xlu0 %66
    %vm69 = vcmask 851712
    %70 = vst.msk [vmem:[#allocation5] sm:$0xff] %vm69, %v67
    %v71 = vld [vmem:[#allocation2] sm:$0xff]
    %73 = vrot.lane.b32.xlu0 %v71, 56
    %v74 = vpop.permute.xlu0 %73
    %vm76 = vcmask 982912
    %77 = vst.msk [vmem:[#allocation5] sm:$0xff] %vm76, %v74
    // Predicated region
    $region10: #{tpu_custom_call.1} parent=1 // pred_check
      _
    $region11: #{tpu_custom_call.1} parent=1 // pred_check_branch
      %79 = sbr.rel (0) target = $region13
    $region12: #{tpu_custom_call.1} parent=1 // pred_region
      %81 = vsyncadd [#allocation4], 112
      %s82 = sshll.u32 [#allocation5], 4
      %s83 = int_to_ptr.vmem [resolvable:$true] %s82
      %s84 = sshll.u32 %s1, 4
      %s85 = int_to_ptr.hbm [resolvable:$true] %s84
      %90 = dma.vmem_to_hbm [thread:$0]  %s83, 16, %s85, [#allocation4], 16, 16, 1
    $region13: #{tpu_custom_call.1} parent=1 // pred_fallthru
      _
    // Predicated region
    $region14: #{tpu_custom_call.1} parent=1 // pred_check
      _
    $region15: #{tpu_custom_call.1} parent=1 // pred_check_branch
      %92 = sbr.rel (0) target = $region17
    $region16: #{tpu_custom_call.1} parent=1 // pred_region
      %94 = dma.done [#allocation4], 128
    $region17: #{tpu_custom_call.1} parent=1 // pred_fallthru
      _
    %95 = vsyncpa [#allocation3], 1
    %96 = vsyncpa [#allocation4], 1

</llo_original>
